<compile_context>
chip_gen: v7x
topology: tpu7x:2x2x1
jax: 0.10.0
libtpu: 0.0.40
codegen_flags: <defaults>
</compile_context>

<pallas_src>
import functools
import math

import jax
import jax.numpy as jnp
from jax.experimental import pallas as pl
from jax.experimental.pallas import tpu as pltpu


# ---------------------------------------------------------------------------
# Hardware / tiling helpers
# ---------------------------------------------------------------------------
@functools.lru_cache(maxsize=None)
def _vmem_limit_bytes():
    """Generation-aware scoped-VMEM cap (v5e/v6e: 128 MiB physical, v7x: 64 MiB)."""
    try:
        phys = int(pltpu.get_tpu_info().vmem_capacity_bytes)
    except Exception:
        phys = 64 * 1024 * 1024          # conservative: assume v7x
    return int(min(max(phys - (64 << 20), phys // 2), 96 << 20))


def _pick_tile(dim, preferred, base):
    """Largest tile <= preferred dividing `dim`, preferring 2*base alignment
    (fuller 256-wide MXU rows on v6e/v7x), then base alignment, else full dim."""
    if dim <= preferred:
        return dim
    for b in (2 * base, base):
        t = (preferred // b) * b
        while t >= b:
            if dim % t == 0:
                return t
            t -= b
    return dim


def _pick_head_group(num_heads, dh, lq, lk, batch, budget_bytes):
    """Heads processed per attention grid step.

    Legal G: divides num_heads and keeps the (8,128) block constraints
    (G % 8 == 0 and (G*dh) % 128 == 0, or G covers all heads).  Among groups
    that fit the VMEM budget, prefer ones that leave >= 2 grid steps (dual
    TensorCores / pipelining), then the largest.
    """
    def legal(g):
        if num_heads % g:
            return False
        if g == num_heads:
            return True
        return (g % 8 == 0) and ((g * dh) % 128 == 0)

    def footprint(g):
        blk_in = g * dh * (lq + 2 * lk)              # q + k + v block elements
        blk_out = lq * g * dh + g * lq * lk          # ctx + attn block elements
        dbuf = 2 * 4 * (blk_in + blk_out)            # double-buffered f32 pipeline blocks
        tmp = 4 * (blk_in + 3 * g * lq * lk + 2 * g * lq * dh) \
            + 2 * (blk_in + g * lq * lk)             # in-kernel f32 + bf16 temporaries
        return dbuf + tmp

    legal_gs = [g for g in range(1, num_heads + 1) if legal(g)]
    fits = [g for g in legal_gs if footprint(g) <= budget_bytes]
    if not fits:
        # TODO(synk): flash-tile over Lk for very long sequences; until then
        #             fall back to the smallest legal head group.
        return min(legal_gs)
    multi_step = [g for g in fits if batch * (num_heads // g) >= 2]
    return max(multi_step) if multi_step else max(fits)


# ---------------------------------------------------------------------------
# Kernel 1: tiled linear projection  y = x @ W + b   (W already (in, out))
# grid = (M/tm, N/tn, K/tk), K innermost ("arbitrary"), f32 accumulator scratch,
# bf16 MXU operands.
# ---------------------------------------------------------------------------
def _linear_kernel(x_ref, w_ref, b_ref, o_ref, acc_ref):
    @pl.when(pl.program_id(2) == 0)
    def _():
        acc_ref[...] = jnp.zeros_like(acc_ref)

    acc_ref[...] += jnp.dot(x_ref[...].astype(jnp.bfloat16),
                            w_ref[...].astype(jnp.bfloat16),
                            preferred_element_type=jnp.float32)

    @pl.when(pl.program_id(2) == pl.num_programs(2) - 1)
    def _():
        o_ref[...] = (acc_ref[...] + b_ref[...]).astype(o_ref.dtype)


def _linear(x2d, w_t, b):
    """x2d: (M, K) @ w_t: (K, N) + b: (N,) -> (M, N)  (tiled, pipelined)."""
    M, K = x2d.shape
    N = w_t.shape[1]
    tm = _pick_tile(M, 512, 8)
    tn = _pick_tile(N, 512, 128)
    tk = _pick_tile(K, 512, 128)
    return pl.pallas_call(
        _linear_kernel,
        out_shape=jax.ShapeDtypeStruct((M, N), jnp.float32),
        grid=(M // tm, N // tn, K // tk),
        in_specs=[
            pl.BlockSpec((tm, tk), lambda i, j, k: (i, k)),
            pl.BlockSpec((tk, tn), lambda i, j, k: (k, j)),
            pl.BlockSpec((1, tn), lambda i, j, k: (0, j)),
        ],
        out_specs=pl.BlockSpec((tm, tn), lambda i, j, k: (i, j)),
        scratch_shapes=[pltpu.VMEM((tm, tn), jnp.float32)],
        compiler_params=pltpu.CompilerParams(
            dimension_semantics=("parallel", "parallel", "arbitrary"),
            vmem_limit_bytes=_vmem_limit_bytes()),
    )(x2d, w_t, b.reshape(1, N))


# ---------------------------------------------------------------------------
# Kernel 2: fused Q/K/V projection for self-attention.
# Each grid step loads one x tile and reuses it for the three weight matmuls;
# emits three separate outputs (no concatenated weights, no output slices).
# ---------------------------------------------------------------------------
def _qkv_kernel(x_ref, wq_ref, wk_ref, wv_ref, bq_ref, bk_ref, bv_ref,
                q_ref, k_ref, v_ref, qacc_ref, kacc_ref, vacc_ref):
    @pl.when(pl.program_id(2) == 0)
    def _():
        qacc_ref[...] = jnp.zeros_like(qacc_ref)
        kacc_ref[...] = jnp.zeros_like(kacc_ref)
        vacc_ref[...] = jnp.zeros_like(vacc_ref)

    x = x_ref[...].astype(jnp.bfloat16)          # loaded once, reused 3x
    qacc_ref[...] += jnp.dot(x, wq_ref[...].astype(jnp.bfloat16),
                             preferred_element_type=jnp.float32)
    kacc_ref[...] += jnp.dot(x, wk_ref[...].astype(jnp.bfloat16),
                             preferred_element_type=jnp.float32)
    vacc_ref[...] += jnp.dot(x, wv_ref[...].astype(jnp.bfloat16),
                             preferred_element_type=jnp.float32)

    @pl.when(pl.program_id(2) == pl.num_programs(2) - 1)
    def _():
        q_ref[...] = (qacc_ref[...] + bq_ref[...]).astype(q_ref.dtype)
        k_ref[...] = (kacc_ref[...] + bk_ref[...]).astype(k_ref.dtype)
        v_ref[...] = (vacc_ref[...] + bv_ref[...]).astype(v_ref.dtype)


def _qkv_projection(x2d, p):
    M, K = x2d.shape
    N = p["wq_t"].shape[1]
    tm = _pick_tile(M, 512, 8)
    tn = _pick_tile(N, 512, 128)
    tk = _pick_tile(K, 512, 128)
    x_spec = pl.BlockSpec((tm, tk), lambda i, j, k: (i, k))
    w_spec = pl.BlockSpec((tk, tn), lambda i, j, k: (k, j))
    b_spec = pl.BlockSpec((1, tn), lambda i, j, k: (0, j))
    o_spec = pl.BlockSpec((tm, tn), lambda i, j, k: (i, j))
    o_shape = jax.ShapeDtypeStruct((M, N), jnp.float32)
    return pl.pallas_call(
        _qkv_kernel,
        out_shape=(o_shape, o_shape, o_shape),
        grid=(M // tm, N // tn, K // tk),
        in_specs=[x_spec, w_spec, w_spec, w_spec, b_spec, b_spec, b_spec],
        out_specs=(o_spec, o_spec, o_spec),
        scratch_shapes=[pltpu.VMEM((tm, tn), jnp.float32) for _ in range(3)],
        compiler_params=pltpu.CompilerParams(
            dimension_semantics=("parallel", "parallel", "arbitrary"),
            vmem_limit_bytes=_vmem_limit_bytes()),
    )(x2d, p["wq_t"], p["wk_t"], p["wv_t"],
      p["bq"].reshape(1, N), p["bk"].reshape(1, N), p["bv"].reshape(1, N))


# ---------------------------------------------------------------------------
# Kernel 3: scaled dot-product attention, G heads of one batch element per step.
#   q_ref/k_ref/v_ref : (1, L, G, dh)
#   ctx_ref           : (1, Lq, G*dh)    -> (B, Lq, d_model) output (lane-dense)
#   attn_ref          : (G, 1, Lq, Lk)   -> (H, B, Lq, Lk) output (head-major)
# ---------------------------------------------------------------------------
def _attn_kernel(q_ref, k_ref, v_ref, ctx_ref, attn_ref, *, inv_sqrt_dh):
    lq = q_ref.shape[1]
    g = q_ref.shape[2]
    dh = q_ref.shape[3]

    # One head-group-wide relayout per operand (instead of G strided per-head
    # slices); the 1/sqrt(dh) scale is a VPU multiply folded onto the q tile.
    q = jnp.transpose(q_ref[0], (1, 0, 2)) * inv_sqrt_dh     # (G, Lq, dh)
    k = jnp.transpose(k_ref[0], (1, 0, 2))                   # (G, Lk, dh)
    v = jnp.transpose(v_ref[0], (1, 0, 2))                   # (G, Lk, dh)

    # Single batched MXU contraction over all G heads; bf16 operands, f32 acc.
    s = jnp.einsum("gqd,gkd->gqk",
                   q.astype(jnp.bfloat16), k.astype(jnp.bfloat16),
                   preferred_element_type=jnp.float32)        # (G, Lq, Lk)

    # Numerically stable softmax in f32 (exact division: attn is user-visible).
    s = s - jnp.max(s, axis=-1, keepdims=True)
    e = jnp.exp(s)
    p = e / jnp.sum(e, axis=-1, keepdims=True)                # (G, Lq, Lk)

    ctx = jnp.einsum("gqk,gkd->gqd",
                     p.astype(jnp.bfloat16), v.astype(jnp.bfloat16),
                     preferred_element_type=jnp.float32)      # (G, Lq, dh)

    attn_ref[...] = p.reshape(attn_ref.shape).astype(attn_ref.dtype)
    # Lane-dense context store: one (Lq, G*dh) slab per step instead of G
    # masked dh-wide stores.
    ctx_ref[0] = jnp.transpose(ctx, (1, 0, 2)).reshape(lq, g * dh).astype(ctx_ref.dtype)


def _attention(q, k, v, *, inv_sqrt_dh):
    """q/k/v: (B, L, H, dh) -> ctx (B, Lq, H*dh), attn (H, B, Lq, Lk)."""
    B, Lq, H, dh = q.shape
    Lk = k.shape[1]
    vmem_limit = _vmem_limit_bytes()
    G = _pick_head_group(H, dh, Lq, Lk, B, budget_bytes=(vmem_limit * 3) // 4)
    kernel = functools.partial(_attn_kernel, inv_sqrt_dh=inv_sqrt_dh)
    return pl.pallas_call(
        kernel,
        out_shape=(
            jax.ShapeDtypeStruct((B, Lq, H * dh), jnp.float32),
            jax.ShapeDtypeStruct((H, B, Lq, Lk), jnp.float32),
        ),
        grid=(B, H // G),
        in_specs=[
            pl.BlockSpec((1, Lq, G, dh), lambda b, h: (b, 0, h, 0)),
            pl.BlockSpec((1, Lk, G, dh), lambda b, h: (b, 0, h, 0)),
            pl.BlockSpec((1, Lk, G, dh), lambda b, h: (b, 0, h, 0)),
        ],
        out_specs=(
            pl.BlockSpec((1, Lq, G * dh), lambda b, h: (b, 0, h)),
            pl.BlockSpec((G, 1, Lq, Lk), lambda b, h: (h, b, 0, 0)),
        ),
        compiler_params=pltpu.CompilerParams(
            dimension_semantics=("parallel", "parallel"),
            vmem_limit_bytes=vmem_limit),
    )(q, k, v)


# ---------------------------------------------------------------------------
# Parameter prep (one-time, the analogue of nn.Module.__init__)
# ---------------------------------------------------------------------------
def prepare_mha_params(params):
    """PyTorch Linear weights are (out, in); transpose to (in, out) once here so
    the forward pass does no per-call weight transposes / concatenations."""
    return {
        "wq_t": jnp.transpose(jnp.asarray(params["wq"])),
        "wk_t": jnp.transpose(jnp.asarray(params["wk"])),
        "wv_t": jnp.transpose(jnp.asarray(params["wv"])),
        "bq": jnp.asarray(params["bq"]),
        "bk": jnp.asarray(params["bk"]),
        "bv": jnp.asarray(params["bv"]),
    }


# ---------------------------------------------------------------------------
# MultiHeadAttention forward
# ---------------------------------------------------------------------------
def multi_head_attention(prepared, query, key, value, num_heads, mask=None):
    if mask is not None:
        raise NotImplementedError("mask is not supported")  # TODO(synk): mask path

    B, Lq, d_model = query.shape
    Lk = key.shape[1]
    assert value.shape[1] == Lk
    assert d_model % num_heads == 0
    dh = d_model // num_heads

    if (query is key) and (key is value):
        # Self-attention: fused projection kernel (x streamed from HBM once,
        # three separate outputs).  NOTE: the `is` identity check is
        # conservative; if it does not trigger, the path below is still correct.
        q2d, k2d, v2d = _qkv_projection(query.reshape(B * Lq, d_model), prepared)
    else:
        q2d = _linear(query.reshape(B * Lq, d_model), prepared["wq_t"], prepared["bq"])
        k2d = _linear(key.reshape(B * Lk, d_model), prepared["wk_t"], prepared["bk"])
        v2d = _linear(value.reshape(B * Lk, d_model), prepared["wv_t"], prepared["bv"])

    # Free head-split views; head selection happens via BlockSpec index maps.
    q = q2d.reshape(B, Lq, num_heads, dh)
    k = k2d.reshape(B, Lk, num_heads, dh)
    v = v2d.reshape(B, Lk, num_heads, dh)

    ctx, attn = _attention(q, k, v, inv_sqrt_dh=1.0 / math.sqrt(dh))
    # ctx is already (B, Lq, num_heads * d_head); attn is head-major so the
    # reference (num_heads * B, Lq, Lk) layout is a free reshape.
    return ctx, attn.reshape(num_heads * B, Lq, Lk)


# ---------------------------------------------------------------------------
# Pure-JAX reference for a correctness sanity check
# ---------------------------------------------------------------------------
def reference_mha(params, query, key, value, num_heads):
    batch = value.shape[0]
    d_model = query.shape[-1]
    d_head = d_model // num_heads

    def project(x, w, b):
        return (x @ w.T + b).reshape(x.shape[0], x.shape[1], num_heads, d_head)

    q = project(query, params["wq"], params["bq"])
    k = project(key, params["wk"], params["bk"])
    v = project(value, params["wv"], params["bv"])

    def flat(t):
        return jnp.transpose(t, (2, 0, 1, 3)).reshape(num_heads * batch, t.shape[1], d_head)

    qf, kf, vf = flat(q), flat(k), flat(v)
    score = jnp.einsum("bqd,bkd->bqk", qf, kf) / math.sqrt(d_head)
    attn = jax.nn.softmax(score, axis=-1)
    ctx = jnp.einsum("bqk,bkd->bqd", attn, vf)
    lq = ctx.shape[1]
    ctx = ctx.reshape(num_heads, batch, lq, d_head)
    ctx = jnp.transpose(ctx, (1, 2, 0, 3)).reshape(batch, lq, num_heads * d_head)
    return ctx, attn


if __name__ == "__main__":
    batch, seq_len, d_model, num_heads = 2, 8, 32, 8

    key0 = jax.random.PRNGKey(0)
    ks = jax.random.split(key0, 9)

    bound = 1.0 / math.sqrt(d_model)
    params = {
        "wq": jax.random.uniform(ks[0], (d_model, d_model), jnp.float32, -bound, bound),
        "bq": jax.random.uniform(ks[1], (d_model,), jnp.float32, -bound, bound),
        "wk": jax.random.uniform(ks[2], (d_model, d_model), jnp.float32, -bound, bound),
        "bk": jax.random.uniform(ks[3], (d_model,), jnp.float32, -bound, bound),
        "wv": jax.random.uniform(ks[4], (d_model, d_model), jnp.float32, -bound, bound),
        "bv": jax.random.uniform(ks[5], (d_model,), jnp.float32, -bound, bound),
    }
    prepared = prepare_mha_params(params)   # one-time weight prep

    query = jax.random.normal(ks[6], (batch, seq_len, d_model), jnp.float32)
    key_t = jax.random.normal(ks[7], (batch, seq_len, d_model), jnp.float32)
    value = jax.random.normal(ks[8], (batch, seq_len, d_model), jnp.float32)

    # Tolerance accounts for bf16 MXU operands (f32 accumulation) in the
    # projection and attention matmuls.
    TOL = dict(atol=3e-2, rtol=3e-2)

    # Cross-attention style call (separate projections path).
    ctx, attn = multi_head_attention(prepared, query, key_t, value, num_heads)
    ctx = jax.block_until_ready(ctx)
    attn = jax.block_until_ready(attn)

    ctx_ref, attn_ref = reference_mha(params, query, key_t, value, num_heads)
    assert ctx.shape == (batch, seq_len, d_model)
    assert attn.shape == (num_heads * batch, seq_len, seq_len)
    assert jnp.allclose(ctx, ctx_ref, **TOL)
    assert jnp.allclose(attn, attn_ref, **TOL)

    # Self-attention call (exercises the fused three-output projection kernel).
    ctx2, attn2 = multi_head_attention(prepared, query, query, query, num_heads)
    ctx2 = jax.block_until_ready(ctx2)
    attn2 = jax.block_until_ready(attn2)
    ctx2_ref, attn2_ref = reference_mha(params, query, query, query, num_heads)
    assert jnp.allclose(ctx2, ctx2_ref, **TOL)
    assert jnp.allclose(attn2, attn2_ref, **TOL)

    print("KERNEL_OK")
</pallas_src>

<mosaic_0001>
module attributes {stable_mosaic.version = 11 : i64} {
  func.func @_linear_kernel(%arg0: i32, %arg1: i32, %arg2: i32, %arg3: memref<16x32xf32, #tpu.memory_space<vmem>>, %arg4: memref<32x32xf32, #tpu.memory_space<vmem>>, %arg5: memref<1x32xf32, #tpu.memory_space<vmem>>, %arg6: memref<16x32xf32, #tpu.memory_space<vmem>>, %arg7: memref<16x32xf32, #tpu.memory_space<vmem>>) attributes {dimension_semantics = [#tpu.dimension_semantics<parallel>, #tpu.dimension_semantics<parallel>, #tpu.dimension_semantics<arbitrary>], iteration_bounds = array<i64: 1, 1, 1>, scalar_prefetch = 0 : i64, scratch_operands = 1 : i64, tpu.core_type = #tpu.core_type<tc>, window_params = [{transform_indices = @transform_0, window_bounds = array<i64: 16, 32>}, {transform_indices = @transform_1, window_bounds = array<i64: 32, 32>}, {transform_indices = @transform_2, window_bounds = array<i64: 1, 32>}, {transform_indices = @transform_3, window_bounds = array<i64: 16, 32>}]} {
    %c0_i32 = arith.constant 0 : i32
    %0 = arith.cmpi eq, %arg2, %c0_i32 : i32
    %1 = arith.extui %0 : i1 to i32
    %c0_i32_0 = arith.constant 0 : i32
    %2 = arith.cmpi ne, %1, %c0_i32_0 : i32
    scf.if %2 {
      %cst_10 = arith.constant 0.000000e+00 : f32
      %14 = vector.broadcast %cst_10 : f32 to vector<16x32xf32>
      %c0_11 = arith.constant 0 : index
      %c0_12 = arith.constant 0 : index
      %15 = vector.load %arg7[%c0_11, %c0_12] : memref<16x32xf32, #tpu.memory_space<vmem>>, vector<16x32xf32>
      tpu.vector_store %arg7[%c0_11, %c0_12], %14 {strides = array<i32>} : memref<16x32xf32, #tpu.memory_space<vmem>>, vector<16x32xf32>,
    } else {
    }
    %c0 = arith.constant 0 : index
    %c0_1 = arith.constant 0 : index
    %3 = vector.load %arg7[%c0, %c0_1] : memref<16x32xf32, #tpu.memory_space<vmem>>, vector<16x32xf32>
    %c0_2 = arith.constant 0 : index
    %c0_3 = arith.constant 0 : index
    %4 = vector.load %arg3[%c0_2, %c0_3] : memref<16x32xf32, #tpu.memory_space<vmem>>, vector<16x32xf32>
    %5 = arith.truncf %4 : vector<16x32xf32> to vector<16x32xbf16>
    %c0_4 = arith.constant 0 : index
    %c0_5 = arith.constant 0 : index
    %6 = vector.load %arg4[%c0_4, %c0_5] : memref<32x32xf32, #tpu.memory_space<vmem>>, vector<32x32xf32>
    %7 = arith.truncf %6 : vector<32x32xf32> to vector<32x32xbf16>
    %cst = arith.constant dense<0.000000e+00> : vector<16x32xf32>
    %8 = tpu.matmul %5, %7, %cst {dimension_numbers = #tpu.dot_dimension_numbers<[1], [0], [0], [1], [0, 0, 1, 1], [], []>} : vector<16x32xbf16>, vector<32x32xbf16>, vector<16x32xf32> -> vector<16x32xf32>
    %9 = arith.addf %3, %8 : vector<16x32xf32>
    %c0_6 = arith.constant 0 : index
    %c0_7 = arith.constant 0 : index
    %10 = vector.load %arg7[%c0_6, %c0_7] : memref<16x32xf32, #tpu.memory_space<vmem>>, vector<16x32xf32>
    tpu.vector_store %arg7[%c0_6, %c0_7], %9 {strides = array<i32>} : memref<16x32xf32, #tpu.memory_space<vmem>>, vector<16x32xf32>,
    %c0_i32_8 = arith.constant 0 : i32
    %11 = arith.cmpi eq, %arg2, %c0_i32_8 : i32
    %12 = arith.extui %11 : i1 to i32
    %c0_i32_9 = arith.constant 0 : i32
    %13 = arith.cmpi ne, %12, %c0_i32_9 : i32
    scf.if %13 {
      %c0_10 = arith.constant 0 : index
      %c0_11 = arith.constant 0 : index
      %14 = vector.load %arg7[%c0_10, %c0_11] : memref<16x32xf32, #tpu.memory_space<vmem>>, vector<16x32xf32>
      %c0_12 = arith.constant 0 : index
      %c0_13 = arith.constant 0 : index
      %15 = vector.load %arg5[%c0_12, %c0_13] : memref<1x32xf32, #tpu.memory_space<vmem>>, vector<1x32xf32>
      %16 = vector.broadcast %15 : vector<1x32xf32> to vector<16x32xf32>
      %17 = arith.addf %14, %16 : vector<16x32xf32>
      %c0_14 = arith.constant 0 : index
      %c0_15 = arith.constant 0 : index
      %18 = vector.load %arg6[%c0_14, %c0_15] : memref<16x32xf32, #tpu.memory_space<vmem>>, vector<16x32xf32>
      tpu.vector_store %arg6[%c0_14, %c0_15], %17 {strides = array<i32>} : memref<16x32xf32, #tpu.memory_space<vmem>>, vector<16x32xf32>,
    } else {
    }
    return
  }
  func.func @transform_0(%arg0: i32, %arg1: i32, %arg2: i32) -> (i32, i32) {
    %c0_i32 = arith.constant 0 : i32
    return %arg0, %arg2 : i32, i32
  }
  func.func @transform_1(%arg0: i32, %arg1: i32, %arg2: i32) -> (i32, i32) {
    %c0_i32 = arith.constant 0 : i32
    return %arg2, %arg1 : i32, i32
  }
  func.func @transform_2(%arg0: i32, %arg1: i32, %arg2: i32) -> (i32, i32) {
    %c0_i32 = arith.constant 0 : i32
    %c0_i32_0 = arith.constant 0 : i32
    return %c0_i32, %arg1 : i32, i32
  }
  func.func @transform_3(%arg0: i32, %arg1: i32, %arg2: i32) -> (i32, i32) {
    %c0_i32 = arith.constant 0 : i32
    return %arg0, %arg1 : i32, i32
  }
}

</mosaic_0001>

<llo_original>
// kernel: tpu_custom_call.1
$region0: #{tpu_custom_call.1}
  #allocation0 [shape = 'u32[]', space=smem, size = 0x4, offset = 0x4, fixed_abs, tag = 'smem constant byte address 0x4 - core index']
  #allocation1 [shape = 'u32[144,128]{1,0:T(1,128)}', space=vmem, size = 0x12000, scoped, tag = 'internal scratch']
  #allocation2 [shape = 'f32[16,32]{1,0:T(8,128)}', space=vmem, size = 0x2000, scoped, tag = 'scratch operand']
  %s0 = inlined_call_operand.hbm [shape: f32[16,32], index: 0, kind: input, shape index: {}]
  %s1 = inlined_call_operand.hbm [shape: f32[32,32], index: 1, kind: input, shape index: {}]
  %s2 = inlined_call_operand.vmem [shape: f32[1,32], index: 2, kind: input, shape index: {}]
  %s3 = inlined_call_operand.hbm [shape: f32[16,32], index: 3, kind: output, shape index: {}]
  %s4 = sld [smem:[#allocation0]]
  $region38: #{tpu_custom_call.1} parent=0
    _
  %s6 = ssub.s32 1, %s4
  %s7 = scalar_select 0, %s6, %s4
  $region1: #{tpu_custom_call.1} parent=0
    #allocation3 [shape = 'u8[8192]{0}', space=vmem, size = 0x2000, scoped, tag = 'input window, operand 0, single buffered']
    #allocation4 [shape = 's32[1]{0}', space=sflag, size = 0x4, scoped, tag = 'scoped memory for tpu_custom_call.1']
    #allocation5 [shape = 's32[1]{0}', space=sflag, size = 0x4, scoped, tag = 'scoped memory for tpu_custom_call.1']
    #allocation6 [shape = 'u8[16384]{0}', space=vmem, size = 0x4000, scoped, tag = 'input window, operand 1, single buffered']
    #allocation7 [shape = 's32[1]{0}', space=sflag, size = 0x4, scoped, tag = 'scoped memory for tpu_custom_call.1']
    #allocation8 [shape = 'u8[8192]{0}', space=vmem, size = 0x2000, scoped, tag = 'output window, operand 0, single buffered']
    %8 = vsyncpa [#allocation4], 0
    %9 = vsyncpa [#allocation7], 0
    %10 = vsyncpa [#allocation5], 0
    // Predicated region
    $region2: #{tpu_custom_call.1} parent=1 // pred_check
      _
    $region3: #{tpu_custom_call.1} parent=1 // pred_check_branch
      %12 = sbr.rel (0) target = $region5
    $region4: #{tpu_custom_call.1} parent=1 // pred_region
      %s14 = ssub.s32 256, 256
      %15 = vsyncadd [#allocation4], %s14
      %s16 = sshll.u32 [#allocation3], 4
      %s17 = int_to_ptr.vmem [resolvable:$true] %s16
      %22 = dma.hbm_to_vmem [thread:$0]  %s0, 256, %s17, [#allocation4], 128, 128, 8
    $region5: #{tpu_custom_call.1} parent=1 // pred_fallthru
      _
    // Predicated region
    $region6: #{tpu_custom_call.1} parent=1 // pred_check
      _
    $region7: #{tpu_custom_call.1} parent=1 // pred_check_branch
      %24 = sbr.rel (0) target = $region9
    $region8: #{tpu_custom_call.1} parent=1 // pred_region
      %s26 = ssub.s32 512, 512
      %27 = vsyncadd [#allocation7], %s26
      %s28 = sshll.u32 [#allocation6], 4
      %s29 = int_to_ptr.vmem [resolvable:$true] %s28
      %34 = dma.hbm_to_vmem [thread:$0]  %s1, 512, %s29, [#allocation7], 128, 128, 8
    $region9: #{tpu_custom_call.1} parent=1 // pred_fallthru
      _
    // Predicated region
    $region10: #{tpu_custom_call.1} parent=1 // pred_check
      _
    $region11: #{tpu_custom_call.1} parent=1 // pred_check_branch
      %36 = sbr.rel (0) target = $region13
    $region12: #{tpu_custom_call.1} parent=1 // pred_region
      _
    $region13: #{tpu_custom_call.1} parent=1 // pred_fallthru
      _
    // Predicated region
    $region14: #{tpu_custom_call.1} parent=1 // pred_check
      _
    $region15: #{tpu_custom_call.1} parent=1 // pred_check_branch
      %38 = sbr.rel (0) target = $region17
    $region16: #{tpu_custom_call.1} parent=1 // pred_region
      %39 = dma.done [#allocation4], 256
    $region17: #{tpu_custom_call.1} parent=1 // pred_fallthru
      _
    // Predicated region
    $region18: #{tpu_custom_call.1} parent=1 // pred_check
      _
    $region19: #{tpu_custom_call.1} parent=1 // pred_check_branch
      %41 = sbr.rel (0) target = $region21
    $region20: #{tpu_custom_call.1} parent=1 // pred_region
      %42 = dma.done [#allocation7], 512
    $region21: #{tpu_custom_call.1} parent=1 // pred_fallthru
      _
    %p44 = scmp.eq.s32.totalorder 0, 0
    // Predicated region
    $region22: #{tpu_custom_call.1} parent=1 // pred_check
      %p45 = pneg %p44
    $region23: #{tpu_custom_call.1} parent=1 // pred_check_branch
      %47 = sbr.rel (%p45) target = $region25
    $region24: #{tpu_custom_call.1} parent=1 // pred_region
      %vm48 = vcmask 261120
      %49 = vst.msk [vmem:[#allocation2] sm:$0xff] %vm48, 0.0
      %50 = vst.msk [vmem:[#allocation2 + $0x8] sm:$0xff] %vm48, 0.0
    $region25: #{tpu_custom_call.1} parent=1 // pred_fallthru
      _
    %v51 = vld [vmem:[#allocation2] sm:$0xff]
    %v52 = vld [vmem:[#allocation2 + $0x8] sm:$0xff]
    %v53 = vld [vmem:[#allocation3] sm:$0xff]
    %v54 = vld [vmem:[#allocation3 + $0x8] sm:$0xff]
    %v55 = vpack.c.bf16 %v54, %v53
    %v56 = vld [vmem:[#allocation6] sm:$0xff]
    %v57 = vld [vmem:[#allocation6 + $0x8] sm:$0xff]
    %v58 = vld [vmem:[#allocation6 + $0x10] sm:$0xff]
    %v59 = vld [vmem:[#allocation6 + $0x18] sm:$0xff]
    %v60 = vpack.c.bf16 %v57, %v56
    %v61 = vpack.c.bf16 %v59, %v58
    %vm62 = vcmask 261120
    %v64 = vsel %vm62, %v55, 0
    %66 = vmatprep.subr.bf16.mxu0 0
    %67 = vmatpush1.bf16.msra.mxu0 %v60
    %68 = vmatprep.subr.bf16.mxu0 0
    %69 = vmatpush1.bf16.msra.mxu0 %v61
    %70 = vmatprep.subr.bf16.mxu0 0
    %71 = vmatpush1.bf16.msra.mxu0 0
    %72 = vmatprep.subr.bf16.mxu0 0
    %73 = vmatpush1.bf16.msra.mxu0 0
    %74 = vmatprep.subr.bf16.mxu0 0
    %75 = vmatpush1.bf16.msra.mxu0 0
    %76 = vmatprep.subr.bf16.mxu0 0
    %77 = vmatpush1.bf16.msra.mxu0 0
    %78 = vmatprep.subr.bf16.mxu0 0
    %79 = vmatpush1.bf16.msra.mxu0 0
    %80 = vmatprep.subr.bf16.mxu0 0
    %81 = vmatpush1.bf16.msra.mxu0 0
    %82 = vmatprep.subr.bf16.mxu0 0
    %83 = vmatpush1.bf16.msra.mxu0 0
    %84 = vmatprep.subr.bf16.mxu0 0
    %85 = vmatpush1.bf16.msra.mxu0 0
    %86 = vmatprep.subr.bf16.mxu0 0
    %87 = vmatpush1.bf16.msra.mxu0 0
    %88 = vmatprep.subr.bf16.mxu0 0
    %89 = vmatpush1.bf16.msra.mxu0 0
    %90 = vmatprep.subr.bf16.mxu0 0
    %91 = vmatpush1.bf16.msra.mxu0 0
    %92 = vmatprep.subr.bf16.mxu0 0
    %93 = vmatpush1.bf16.msra.mxu0 0
    %94 = vmatprep.subr.bf16.mxu0 0
    %95 = vmatpush1.bf16.msra.mxu0 0
    %96 = vmatprep.subr.bf16.mxu0 0
    %97 = vmatpush1.bf16.msra.mxu0 0
    %98 = vmatprep.mubr.bf16.mxu0 0
    %99 = vmatmul.mubr.bf16.gmra.mrb[0].mxu0 %v64
    %v100 = vpop.f32.mrb[0].mxu0
    %v101 = vadd.f32 0.0, %v100
    %v102 = vpop.f32.mrb[0].mxu0
    %v103 = vpop.f32.mrb[0].mxu0
    %v104 = vadd.f32 0.0, %v103
    %v105 = vpop.f32.mrb[0].mxu0
    %106 = vdwg.mxu0
    %v107 = vadd.f32 %v51, %v101
    %v108 = vadd.f32 %v52, %v104
    %109 = vst.msk [vmem:[#allocation2] sm:$0xff] %vm62, %v107
    %110 = vst.msk [vmem:[#allocation2 + $0x8] sm:$0xff] %vm62, %v108
    // Predicated region
    $region26: #{tpu_custom_call.1} parent=1 // pred_check
      %p111 = pneg %p44
    $region27: #{tpu_custom_call.1} parent=1 // pred_check_branch
      %113 = sbr.rel (%p111) target = $region29
    $region28: #{tpu_custom_call.1} parent=1 // pred_region
      %v114 = vld [vmem:[#allocation2] sm:$0xff]
      %v115 = vld [vmem:[#allocation2 + $0x8] sm:$0xff]
      %v116 = vld [vmem:[%s2] sm:$0x1]
      %v118 = vlaneseq
      %v119 = vshrl.u32 %v118, 7
      %v120 = vsub.s32 0, %v119
      %v121 = vrot.slane %v116, %v120
      %v123 = vadd.f32 %v114, %v121
      %v124 = vadd.f32 %v115, %v121
      %125 = vst.msk [vmem:[#allocation8] sm:$0xff] %vm62, %v123
      %126 = vst.msk [vmem:[#allocation8 + $0x8] sm:$0xff] %vm62, %v124
    $region29: #{tpu_custom_call.1} parent=1 // pred_fallthru
      _
    // Predicated region
    $region30: #{tpu_custom_call.1} parent=1 // pred_check
      _
    $region31: #{tpu_custom_call.1} parent=1 // pred_check_branch
      %128 = sbr.rel (0) target = $region33
    $region32: #{tpu_custom_call.1} parent=1 // pred_region
      %s130 = ssub.s32 256, 256
      %131 = vsyncadd [#allocation5], %s130
      %s132 = sshll.u32 [#allocation8], 4
      %s133 = int_to_ptr.vmem [resolvable:$true] %s132
      %138 = dma.vmem_to_hbm [thread:$0]  %s133, 256, %s3, [#allocation5], 128, 128, 8
    $region33: #{tpu_custom_call.1} parent=1 // pred_fallthru
      _
    // Predicated region
    $region34: #{tpu_custom_call.1} parent=1 // pred_check
      _
    $region35: #{tpu_custom_call.1} parent=1 // pred_check_branch
      %140 = sbr.rel (0) target = $region37
    $region36: #{tpu_custom_call.1} parent=1 // pred_region
      %141 = dma.done [#allocation5], 256
    $region37: #{tpu_custom_call.1} parent=1 // pred_fallthru
      _
    %142 = vsyncpa [#allocation4], 1
    %143 = vsyncpa [#allocation7], 1
    %144 = vsyncpa [#allocation5], 1

</llo_original>
